<compile_context>
chip_gen: v7x
topology: tpu7x:2x2x1
jax: 0.10.0
libtpu: 0.0.40
codegen_flags: <defaults>
</compile_context>

<pallas_src>
import functools

import jax
import jax.numpy as jnp
from jax import lax
from jax.experimental import pallas as pl
from jax.experimental.pallas import tpu as pltpu


# ----------------------------------------------------------------------------
# Tiling choice: pad num_train (with zero columns, masked in-kernel) so that a
# (n_split, steps_per_split) grid of tn-wide tiles covers it exactly.
# ----------------------------------------------------------------------------
def _choose_tiling(num_train, tn_target=4096):
    tn_target_tiles = max(1, int(tn_target) // 128)
    cols128 = -(-num_train // 128)
    n_split = 2 if cols128 >= 2 else 1          # feed both TensorCores on v7x
    per_split = -(-cols128 // n_split)
    steps0 = max(1, -(-per_split // tn_target_tiles))
    best = None
    for s in range(steps0, steps0 + 8):          # minimize padding
        t = -(-per_split // s)
        waste = s * t - per_split
        if best is None or waste < best[0]:
            best = (waste, s, t)
        if waste == 0:
            break
    _, steps, tn_tiles = best
    tn = tn_tiles * 128
    return n_split, steps, tn, n_split * steps * tn


# ----------------------------------------------------------------------------
# Fused forward-sums kernel.
#   per tile:  ip  = (u @ U_tile) * 0.5
#              sim = y @ Y_tile
#              ll  = log1p(exp(-|ip|)) + max(ip,0) - (sim>0)*ip   (masked, acc)
#   epilogue (last reduction step of each split):
#              ll_sum  = sum(acc)
#              cl_sum  = sum((y - B_ind^T @ W)^2)
#              reg_sum = sum(W^2)
# Grid = (n_split, steps_per_split): outer axis "parallel" (megacore), inner
# axis "arbitrary" (reduction over num_train tiles).
# ----------------------------------------------------------------------------
def _dsdh_fwd_kernel(u_ref, U_ref, y_ref, Y_ref, W_ref, Bind_ref,
                     ll_ref, cl_ref, reg_ref, acc_ref, *, num_train):
    j = pl.program_id(1)

    @pl.when(j == 0)
    def _():
        acc_ref[...] = jnp.zeros_like(acc_ref)

    ip = jnp.dot(u_ref[...], U_ref[...],
                 preferred_element_type=jnp.float32) * 0.5           # (batch, tn)
    sim = jnp.dot(y_ref[...], Y_ref[...],
                  preferred_element_type=jnp.float32)                # (batch, tn)

    ll = (jnp.log1p(jnp.exp(-jnp.abs(ip)))
          + jnp.maximum(ip, 0.0)
          - jnp.where(sim > 0.0, ip, 0.0))

    # Mask the zero-padded tail columns (exact; cheap VPU select).
    tn = U_ref.shape[1]
    base = (pl.program_id(0) * pl.num_programs(1) + j) * tn
    col = base + lax.broadcasted_iota(jnp.int32, ll.shape, 1)
    ll = jnp.where(col < num_train, ll, 0.0)

    acc_ref[...] += ll                                               # pure VPU adds

    @pl.when(j == pl.num_programs(1) - 1)
    def _():
        # Lane-dense (1, 8, 128) broadcast stores (no masked sub-128 vst).
        ll_ref[...] = jnp.full(ll_ref.shape, jnp.sum(acc_ref[...]), jnp.float32)

        # Tiny classification / regularization epilogue — operands are a few
        # KB and already resident, so no separate pallas_call is needed.
        pred = jnp.dot(Bind_ref[...], W_ref[...],
                       preferred_element_type=jnp.float32)           # (batch, n_class)
        diff = y_ref[...] - pred
        cl_ref[...] = jnp.full(cl_ref.shape, jnp.sum(diff * diff), jnp.float32)
        reg_ref[...] = jnp.full(reg_ref.shape,
                                jnp.sum(W_ref[...] * W_ref[...]), jnp.float32)


def dsdh_forward_sums(u, Umat, y, Ymat, W, B_ind_t, *,
                      num_train, n_split, steps_per_split, tn):
    """Returns (likelihood_sum, cl_sum, reg_sum) via a single Pallas kernel."""
    batch, bit = u.shape
    n_class = Ymat.shape[0]
    num_train_pad = Umat.shape[1]
    assert num_train_pad == n_split * steps_per_split * tn

    kernel = functools.partial(_dsdh_fwd_kernel, num_train=num_train)

    # Live VMEM: double-buffered U/Y tiles + accumulator + small resident ops.
    live_bytes = (2 * 4 * tn * (bit + n_class)
                  + 4 * batch * tn
                  + 4 * 2 * (2 * batch * bit + batch * n_class + bit * n_class)
                  + 3 * 2 * 8 * 128 * 4)
    vmem_limit = int(min(max(2 * live_bytes, 16 << 20), 56 << 20))

    out_shape = tuple(jax.ShapeDtypeStruct((n_split, 8, 128), jnp.float32)
                      for _ in range(3))

    ll_o, cl_o, reg_o = pl.pallas_call(
        kernel,
        out_shape=out_shape,
        grid_spec=pltpu.PrefetchScalarGridSpec(
            num_scalar_prefetch=0,
            grid=(n_split, steps_per_split),
            in_specs=[
                pl.BlockSpec((batch, bit), lambda p, j: (0, 0)),                         # u
                pl.BlockSpec((bit, tn), lambda p, j: (0, p * steps_per_split + j)),      # U
                pl.BlockSpec((batch, n_class), lambda p, j: (0, 0)),                     # y
                pl.BlockSpec((n_class, tn), lambda p, j: (0, p * steps_per_split + j)),  # Y
                pl.BlockSpec((bit, n_class), lambda p, j: (0, 0)),                       # W
                pl.BlockSpec((batch, bit), lambda p, j: (0, 0)),                         # B_ind^T
            ],
            out_specs=tuple(pl.BlockSpec((1, 8, 128), lambda p, j: (p, 0, 0))
                            for _ in range(3)),
            scratch_shapes=[pltpu.VMEM((batch, tn), jnp.float32)],
        ),
        compiler_params=pltpu.CompilerParams(
            dimension_semantics=("parallel", "arbitrary"),
            vmem_limit_bytes=vmem_limit),
    )(u, Umat, y, Ymat, W, B_ind_t)

    ll_sum = jnp.sum(ll_o[:, 0, 0])
    cl_sum = cl_o[0, 0, 0]
    reg_sum = reg_o[0, 0, 0]
    return ll_sum, cl_sum, reg_sum


# ----------------------------------------------------------------------------
# updateBandW (DCC iterations): small (bit x bit) inverse + sequential per-row
# sign updates.  Plain JAX glue.  P is loop-invariant inside the per-bit loop
# and hoisted; B_prime/W_prime concatenates are replaced by the algebraically
# identical  B.T@(W@w) - B[i,:]*(w·w)  (no (bit-1, num_train) copies).
# TODO(synk): torch.inverse / the sequential per-row DCC update have no clean
#             Pallas equivalent; they run as ordinary JAX ops.
# ----------------------------------------------------------------------------
def update_b_and_w(B, U, Y, *, bit, mu, nu, eta, dcc_iter):
    n_class = Y.shape[0]
    W = jnp.zeros((bit, n_class), jnp.float32)
    eye = jnp.eye(bit, dtype=jnp.float32)
    for _ in range(dcc_iter):
        W = jnp.linalg.inv(B @ B.T + (nu / mu) * eye) @ (B @ Y.T)
        P = W @ Y + (eta / mu) * U          # hoisted: invariant over the i-loop
        for i in range(bit):
            w = W[i, :]
            # B_prime.T @ (W_prime @ w) == B.T @ (W @ w) - B[i,:] * (w·w)
            excl = (W @ w) @ B - B[i, :] * jnp.dot(w, w)
            B = B.at[i, :].set(jnp.sign(P[i, :] - excl))
    return B, W


# ----------------------------------------------------------------------------
# Full DSDHLoss.forward equivalent.
# ----------------------------------------------------------------------------
def dsdh_loss(u, y, ind, config, bit, *, tn_target=4096):
    num_train = config["num_train"]
    n_class = config["n_class"]
    mu, nu, eta = config["mu"], config["nu"], config["eta"]
    batch = u.shape[0]

    n_split, steps, tn, num_train_pad = _choose_tiling(num_train, tn_target)

    u = u.astype(jnp.float32)
    y = y.astype(jnp.float32)

    # Buffers as freshly __init__'d (built directly at padded width — padding
    # columns are true zeros, so they cost nothing and are masked in-kernel),
    # then forward's column updates: U[:, ind] = u.T ; Y[:, ind] = y.T.
    # TODO(synk): in training, self.U/self.Y/self.B persist across mini-batches;
    #             here they are rebuilt from zeros (single-forward semantics).
    U = jnp.zeros((bit, num_train_pad), jnp.float32).at[:, ind].set(u.T)
    Y = jnp.zeros((n_class, num_train_pad), jnp.float32).at[:, ind].set(y.T)
    B0 = jnp.zeros((bit, num_train_pad), jnp.float32)

    B, W = update_b_and_w(B0, U, Y, bit=bit, mu=mu, nu=nu, eta=eta,
                          dcc_iter=config["dcc_iter"])

    # Pre-transpose B[:, ind] so the in-kernel contraction is on the last dim.
    B_ind_t = B[:, ind].T                        # (batch, bit)

    ll_sum, cl_sum, reg_sum = dsdh_forward_sums(
        u, U, y, Y, W, B_ind_t,
        num_train=num_train, n_split=n_split, steps_per_split=steps, tn=tn)

    likelihood_loss = ll_sum / jnp.float32(batch * num_train)
    cl_loss = cl_sum / jnp.float32(n_class * batch)
    reg_loss = reg_sum / jnp.float32(bit * n_class)
    return likelihood_loss + mu * cl_loss + nu * reg_loss


# Pure-JAX reference (no Pallas) for a correctness sanity check.
def dsdh_loss_ref(u, y, ind, config, bit):
    num_train = config["num_train"]
    n_class = config["n_class"]
    mu, nu, eta = config["mu"], config["nu"], config["eta"]
    U = jnp.zeros((bit, num_train), jnp.float32).at[:, ind].set(u.T)
    Y = jnp.zeros((n_class, num_train), jnp.float32).at[:, ind].set(y.T)
    B0 = jnp.zeros((bit, num_train), jnp.float32)
    B, W = update_b_and_w(B0, U, Y, bit=bit, mu=mu, nu=nu, eta=eta,
                          dcc_iter=config["dcc_iter"])
    ip = (u @ U) * 0.5
    s = (y @ Y > 0).astype(jnp.float32)
    ll = jnp.log1p(jnp.exp(-jnp.abs(ip))) + jnp.maximum(ip, 0.0) - s * ip
    cl = jnp.mean((y.T - W.T @ B[:, ind]) ** 2)
    reg = jnp.mean(W ** 2)
    return jnp.mean(ll) + mu * cl + nu * reg


if __name__ == "__main__":
    batch, bit, n_class, num_train = 8, 32, 16, 256
    config = dict(num_train=num_train, n_class=n_class,
                  mu=0.1, nu=1.0, eta=0.01, dcc_iter=2)

    key = jax.random.PRNGKey(0)
    k_u, k_lbl = jax.random.split(key)
    u = jax.random.normal(k_u, (batch, bit), dtype=jnp.float32)
    labels = jax.random.randint(k_lbl, (batch,), 0, n_class)
    y = jax.nn.one_hot(labels, n_class, dtype=jnp.float32)
    ind = jnp.arange(batch, dtype=jnp.int32)

    loss = dsdh_loss(u, y, ind, config, bit)
    jax.block_until_ready(loss)

    loss_ref = dsdh_loss_ref(u, y, ind, config, bit)
    jax.block_until_ready(loss_ref)

    err = abs(float(loss) - float(loss_ref))
    tol = 5e-2 * abs(float(loss_ref)) + 1e-3
    if err > tol:
        raise AssertionError(
            f"mismatch: pallas={float(loss)} ref={float(loss_ref)} err={err}")

    print("KERNEL_OK")
</pallas_src>

<mosaic_0001>
module attributes {stable_mosaic.version = 11 : i64} {
  func.func @_dsdh_fwd_kernel(%arg0: i32, %arg1: i32, %arg2: memref<8x32xf32, #tpu.memory_space<vmem>>, %arg3: memref<32x128xf32, #tpu.memory_space<vmem>>, %arg4: memref<8x16xf32, #tpu.memory_space<vmem>>, %arg5: memref<16x128xf32, #tpu.memory_space<vmem>>, %arg6: memref<32x16xf32, #tpu.memory_space<vmem>>, %arg7: memref<8x32xf32, #tpu.memory_space<vmem>>, %arg8: memref<1x8x128xf32, #tpu.memory_space<vmem>>, %arg9: memref<1x8x128xf32, #tpu.memory_space<vmem>>, %arg10: memref<1x8x128xf32, #tpu.memory_space<vmem>>, %arg11: memref<8x128xf32, #tpu.memory_space<vmem>>) attributes {dimension_semantics = [#tpu.dimension_semantics<parallel>, #tpu.dimension_semantics<arbitrary>], iteration_bounds = array<i64: 2, 1>, scalar_prefetch = 0 : i64, scratch_operands = 1 : i64, tpu.core_type = #tpu.core_type<tc>, window_params = [{pipeline_mode = #tpu.pipeline_mode<synchronous>, transform_indices = @transform_0, window_bounds = array<i64: 8, 32>}, {transform_indices = @transform_1, window_bounds = array<i64: 32, 128>}, {pipeline_mode = #tpu.pipeline_mode<synchronous>, transform_indices = @transform_2, window_bounds = array<i64: 8, 16>}, {transform_indices = @transform_3, window_bounds = array<i64: 16, 128>}, {pipeline_mode = #tpu.pipeline_mode<synchronous>, transform_indices = @transform_4, window_bounds = array<i64: 32, 16>}, {pipeline_mode = #tpu.pipeline_mode<synchronous>, transform_indices = @transform_5, window_bounds = array<i64: 8, 32>}, {transform_indices = @transform_6, window_bounds = array<i64: 1, 8, 128>}, {transform_indices = @transform_7, window_bounds = array<i64: 1, 8, 128>}, {transform_indices = @transform_8, window_bounds = array<i64: 1, 8, 128>}]} {
    %c0_i32 = arith.constant 0 : i32
    %0 = arith.cmpi eq, %arg1, %c0_i32 : i32
    %1 = arith.extui %0 : i1 to i32
    %c0_i32_0 = arith.constant 0 : i32
    %2 = arith.cmpi ne, %1, %c0_i32_0 : i32
    scf.if %2 {
      %cst_21 = arith.constant 0.000000e+00 : f32
      %40 = vector.broadcast %cst_21 : f32 to vector<8x128xf32>
      %c0_22 = arith.constant 0 : index
      %c0_23 = arith.constant 0 : index
      %41 = vector.load %arg11[%c0_22, %c0_23] : memref<8x128xf32, #tpu.memory_space<vmem>>, vector<8x128xf32>
      tpu.vector_store %arg11[%c0_22, %c0_23], %40 {strides = array<i32>} : memref<8x128xf32, #tpu.memory_space<vmem>>, vector<8x128xf32>,
    } else {
    }
    %c0 = arith.constant 0 : index
    %c0_1 = arith.constant 0 : index
    %3 = vector.load %arg2[%c0, %c0_1] : memref<8x32xf32, #tpu.memory_space<vmem>>, vector<8x32xf32>
    %c0_2 = arith.constant 0 : index
    %c0_3 = arith.constant 0 : index
    %4 = vector.load %arg3[%c0_2, %c0_3] : memref<32x128xf32, #tpu.memory_space<vmem>>, vector<32x128xf32>
    %cst = arith.constant dense<0.000000e+00> : vector<8x128xf32>
    %5 = tpu.matmul %3, %4, %cst {dimension_numbers = #tpu.dot_dimension_numbers<[1], [0], [0], [1], [0, 0, 1, 1], [], []>} : vector<8x32xf32>, vector<32x128xf32>, vector<8x128xf32> -> vector<8x128xf32>
    %cst_4 = arith.constant 5.000000e-01 : f32
    %6 = vector.broadcast %cst_4 : f32 to vector<8x128xf32>
    %7 = arith.mulf %5, %6 : vector<8x128xf32>
    %c0_5 = arith.constant 0 : index
    %c0_6 = arith.constant 0 : index
    %8 = vector.load %arg4[%c0_5, %c0_6] : memref<8x16xf32, #tpu.memory_space<vmem>>, vector<8x16xf32>
    %c0_7 = arith.constant 0 : index
    %c0_8 = arith.constant 0 : index
    %9 = vector.load %arg5[%c0_7, %c0_8] : memref<16x128xf32, #tpu.memory_space<vmem>>, vector<16x128xf32>
    %cst_9 = arith.constant dense<0.000000e+00> : vector<8x128xf32>
    %10 = tpu.matmul %8, %9, %cst_9 {dimension_numbers = #tpu.dot_dimension_numbers<[1], [0], [0], [1], [0, 0, 1, 1], [], []>} : vector<8x16xf32>, vector<16x128xf32>, vector<8x128xf32> -> vector<8x128xf32>
    %11 = math.absf %7 : vector<8x128xf32>
    %cst_10 = arith.constant 0.000000e+00 : f32
    %12 = vector.broadcast %cst_10 : f32 to vector<8x128xf32>
    %13 = arith.subf %12, %11 : vector<8x128xf32>
    %14 = math.exp %13 : vector<8x128xf32>
    %15 = math.log1p %14 : vector<8x128xf32>
    %cst_11 = arith.constant 0.000000e+00 : f32
    %16 = vector.broadcast %cst_11 : f32 to vector<8x128xf32>
    %17 = arith.maximumf %7, %16 : vector<8x128xf32>
    %18 = arith.addf %15, %17 : vector<8x128xf32>
    %cst_12 = arith.constant 0.000000e+00 : f32
    %19 = vector.broadcast %cst_12 : f32 to vector<8x128xf32>
    %20 = arith.cmpf ogt, %10, %19 : vector<8x128xf32>
    %cst_13 = arith.constant 0.000000e+00 : f32
    %21 = vector.broadcast %cst_13 : f32 to vector<8x128xf32>
    %22 = arith.select %20, %7, %21 : vector<8x128xi1>, vector<8x128xf32>
    %23 = arith.subf %18, %22 : vector<8x128xf32>
    %c1_i32 = arith.constant 1 : i32
    %24 = arith.muli %arg0, %c1_i32 : i32
    %25 = arith.addi %24, %arg1 : i32
    %c128_i32 = arith.constant 128 : i32
    %26 = arith.muli %25, %c128_i32 : i32
    %27 = tpu.iota {dimensions = array<i32: 1>} : vector<8x128xi32>
    %28 = vector.broadcast %26 : i32 to vector<8x128xi32>
    %29 = arith.addi %28, %27 : vector<8x128xi32>
    %c256_i32 = arith.constant 256 : i32
    %30 = vector.broadcast %c256_i32 : i32 to vector<8x128xi32>
    %31 = arith.cmpi slt, %29, %30 : vector<8x128xi32>
    %cst_14 = arith.constant 0.000000e+00 : f32
    %32 = vector.broadcast %cst_14 : f32 to vector<8x128xf32>
    %33 = arith.select %31, %23, %32 : vector<8x128xi1>, vector<8x128xf32>
    %c0_15 = arith.constant 0 : index
    %c0_16 = arith.constant 0 : index
    %34 = vector.load %arg11[%c0_15, %c0_16] : memref<8x128xf32, #tpu.memory_space<vmem>>, vector<8x128xf32>
    %35 = arith.addf %34, %33 : vector<8x128xf32>
    %c0_17 = arith.constant 0 : index
    %c0_18 = arith.constant 0 : index
    %36 = vector.load %arg11[%c0_17, %c0_18] : memref<8x128xf32, #tpu.memory_space<vmem>>, vector<8x128xf32>
    tpu.vector_store %arg11[%c0_17, %c0_18], %35 {strides = array<i32>} : memref<8x128xf32, #tpu.memory_space<vmem>>, vector<8x128xf32>,
    %c0_i32_19 = arith.constant 0 : i32
    %37 = arith.cmpi eq, %arg1, %c0_i32_19 : i32
    %38 = arith.extui %37 : i1 to i32
    %c0_i32_20 = arith.constant 0 : i32
    %39 = arith.cmpi ne, %38, %c0_i32_20 : i32
    scf.if %39 {
      %c0_21 = arith.constant 0 : index
      %c0_22 = arith.constant 0 : index
      %40 = vector.load %arg11[%c0_21, %c0_22] : memref<8x128xf32, #tpu.memory_space<vmem>>, vector<8x128xf32>
      %41 = vector.shape_cast %40 : vector<8x128xf32> to vector<1x8x128xf32>
      %cst_23 = arith.constant dense<0.000000e+00> : vector<1xf32>
      %42 = vector.multi_reduction <add>, %41, %cst_23 [1, 2] : vector<1x8x128xf32> to vector<1xf32>
      %43 = vector.shape_cast %42 : vector<1xf32> to vector<1x1x1xf32>
      %44 = vector.extract %43[0, 0, 0] : f32 from vector<1x1x1xf32>
      %45 = vector.broadcast %44 : f32 to vector<1x8x128xf32>
      %c0_24 = arith.constant 0 : index
      %c0_25 = arith.constant 0 : index
      %c0_26 = arith.constant 0 : index
      %46 = vector.load %arg8[%c0_24, %c0_25, %c0_26] : memref<1x8x128xf32, #tpu.memory_space<vmem>>, vector<1x8x128xf32>
      tpu.vector_store %arg8[%c0_24, %c0_25, %c0_26], %45 {strides = array<i32>} : memref<1x8x128xf32, #tpu.memory_space<vmem>>, vector<1x8x128xf32>,
      %c0_27 = arith.constant 0 : index
      %c0_28 = arith.constant 0 : index
      %47 = vector.load %arg7[%c0_27, %c0_28] : memref<8x32xf32, #tpu.memory_space<vmem>>, vector<8x32xf32>
      %c0_29 = arith.constant 0 : index
      %c0_30 = arith.constant 0 : index
      %48 = vector.load %arg6[%c0_29, %c0_30] : memref<32x16xf32, #tpu.memory_space<vmem>>, vector<32x16xf32>
      %cst_31 = arith.constant dense<0.000000e+00> : vector<8x16xf32>
      %49 = tpu.matmul %47, %48, %cst_31 {dimension_numbers = #tpu.dot_dimension_numbers<[1], [0], [0], [1], [0, 0, 1, 1], [], []>} : vector<8x32xf32>, vector<32x16xf32>, vector<8x16xf32> -> vector<8x16xf32>
      %c0_32 = arith.constant 0 : index
      %c0_33 = arith.constant 0 : index
      %50 = vector.load %arg4[%c0_32, %c0_33] : memref<8x16xf32, #tpu.memory_space<vmem>>, vector<8x16xf32>
      %51 = arith.subf %50, %49 : vector<8x16xf32>
      %52 = arith.mulf %51, %51 : vector<8x16xf32>
      %53 = vector.shape_cast %52 : vector<8x16xf32> to vector<1x8x16xf32>
      %cst_34 = arith.constant dense<0.000000e+00> : vector<1xf32>
      %54 = vector.multi_reduction <add>, %53, %cst_34 [1, 2] : vector<1x8x16xf32> to vector<1xf32>
      %55 = vector.shape_cast %54 : vector<1xf32> to vector<1x1x1xf32>
      %56 = vector.extract %55[0, 0, 0] : f32 from vector<1x1x1xf32>
      %57 = vector.broadcast %56 : f32 to vector<1x8x128xf32>
      %c0_35 = arith.constant 0 : index
      %c0_36 = arith.constant 0 : index
      %c0_37 = arith.constant 0 : index
      %58 = vector.load %arg9[%c0_35, %c0_36, %c0_37] : memref<1x8x128xf32, #tpu.memory_space<vmem>>, vector<1x8x128xf32>
      tpu.vector_store %arg9[%c0_35, %c0_36, %c0_37], %57 {strides = array<i32>} : memref<1x8x128xf32, #tpu.memory_space<vmem>>, vector<1x8x128xf32>,
      %c0_38 = arith.constant 0 : index
      %c0_39 = arith.constant 0 : index
      %59 = vector.load %arg6[%c0_38, %c0_39] : memref<32x16xf32, #tpu.memory_space<vmem>>, vector<32x16xf32>
      %c0_40 = arith.constant 0 : index
      %c0_41 = arith.constant 0 : index
      %60 = vector.load %arg6[%c0_40, %c0_41] : memref<32x16xf32, #tpu.memory_space<vmem>>, vector<32x16xf32>
      %61 = arith.mulf %59, %60 : vector<32x16xf32>
      %62 = vector.shape_cast %61 : vector<32x16xf32> to vector<1x32x16xf32>
      %cst_42 = arith.constant dense<0.000000e+00> : vector<1xf32>
      %63 = vector.multi_reduction <add>, %62, %cst_42 [1, 2] : vector<1x32x16xf32> to vector<1xf32>
      %64 = vector.shape_cast %63 : vector<1xf32> to vector<1x1x1xf32>
      %65 = vector.extract %64[0, 0, 0] : f32 from vector<1x1x1xf32>
      %66 = vector.broadcast %65 : f32 to vector<1x8x128xf32>
      %c0_43 = arith.constant 0 : index
      %c0_44 = arith.constant 0 : index
      %c0_45 = arith.constant 0 : index
      %67 = vector.load %arg10[%c0_43, %c0_44, %c0_45] : memref<1x8x128xf32, #tpu.memory_space<vmem>>, vector<1x8x128xf32>
      tpu.vector_store %arg10[%c0_43, %c0_44, %c0_45], %66 {strides = array<i32>} : memref<1x8x128xf32, #tpu.memory_space<vmem>>, vector<1x8x128xf32>,
    } else {
    }
    return
  }
  func.func @transform_0(%arg0: i32, %arg1: i32) -> (i32, i32) {
    %c0_i32 = arith.constant 0 : i32
    %c0_i32_0 = arith.constant 0 : i32
    %c0_i32_1 = arith.constant 0 : i32
    return %c0_i32, %c0_i32_0 : i32, i32
  }
  func.func @transform_1(%arg0: i32, %arg1: i32) -> (i32, i32) {
    %c1_i32 = arith.constant 1 : i32
    %0 = arith.muli %arg0, %c1_i32 : i32
    %1 = arith.addi %0, %arg1 : i32
    %c0_i32 = arith.constant 0 : i32
    %c0_i32_0 = arith.constant 0 : i32
    return %c0_i32, %1 : i32, i32
  }
  func.func @transform_2(%arg0: i32, %arg1: i32) -> (i32, i32) {
    %c0_i32 = arith.constant 0 : i32
    %c0_i32_0 = arith.constant 0 : i32
    %c0_i32_1 = arith.constant 0 : i32
    return %c0_i32, %c0_i32_0 : i32, i32
  }
  func.func @transform_3(%arg0: i32, %arg1: i32) -> (i32, i32) {
    %c1_i32 = arith.constant 1 : i32
    %0 = arith.muli %arg0, %c1_i32 : i32
    %1 = arith.addi %0, %arg1 : i32
    %c0_i32 = arith.constant 0 : i32
    %c0_i32_0 = arith.constant 0 : i32
    return %c0_i32, %1 : i32, i32
  }
  func.func @transform_4(%arg0: i32, %arg1: i32) -> (i32, i32) {
    %c0_i32 = arith.constant 0 : i32
    %c0_i32_0 = arith.constant 0 : i32
    %c0_i32_1 = arith.constant 0 : i32
    return %c0_i32, %c0_i32_0 : i32, i32
  }
  func.func @transform_5(%arg0: i32, %arg1: i32) -> (i32, i32) {
    %c0_i32 = arith.constant 0 : i32
    %c0_i32_0 = arith.constant 0 : i32
    %c0_i32_1 = arith.constant 0 : i32
    return %c0_i32, %c0_i32_0 : i32, i32
  }
  func.func @transform_6(%arg0: i32, %arg1: i32) -> (i32, i32, i32) {
    %c0_i32 = arith.constant 0 : i32
    %c0_i32_0 = arith.constant 0 : i32
    %c0_i32_1 = arith.constant 0 : i32
    return %arg0, %c0_i32, %c0_i32_0 : i32, i32, i32
  }
  func.func @transform_7(%arg0: i32, %arg1: i32) -> (i32, i32, i32) {
    %c0_i32 = arith.constant 0 : i32
    %c0_i32_0 = arith.constant 0 : i32
    %c0_i32_1 = arith.constant 0 : i32
    return %arg0, %c0_i32, %c0_i32_0 : i32, i32, i32
  }
  func.func @transform_8(%arg0: i32, %arg1: i32) -> (i32, i32, i32) {
    %c0_i32 = arith.constant 0 : i32
    %c0_i32_0 = arith.constant 0 : i32
    %c0_i32_1 = arith.constant 0 : i32
    return %arg0, %c0_i32, %c0_i32_0 : i32, i32, i32
  }
}

</mosaic_0001>

<llo_original>
// kernel: tpu_custom_call.1
$region0: #{tpu_custom_call.1}
  #allocation0 [shape = 'u32[]', space=smem, size = 0x4, offset = 0x4, fixed_abs, tag = 'smem constant byte address 0x4 - core index']
  #allocation1 [shape = 'u32[144,128]{1,0:T(1,128)}', space=vmem, size = 0x12000, scoped, tag = 'internal scratch']
  #allocation2 [shape = 'f32[8,128]{1,0:T(8,128)}', space=vmem, size = 0x1000, scoped, tag = 'scratch operand']
  %s0 = inlined_call_operand.vmem [shape: f32[8,32], index: 0, kind: input, shape index: {}]
  %s1 = inlined_call_operand.hbm [shape: f32[32,256], index: 1, kind: input, shape index: {}]
  %s2 = inlined_call_operand.vmem [shape: f32[8,16], index: 2, kind: input, shape index: {}]
  %s3 = inlined_call_operand.vmem [shape: f32[16,256], index: 3, kind: input, shape index: {}]
  %s4 = inlined_call_operand.vmem [shape: f32[32,16], index: 4, kind: input, shape index: {}]
  %s5 = inlined_call_operand.vmem [shape: f32[8,32], index: 5, kind: input, shape index: {}]
  %s6 = inlined_call_operand.hbm [shape: f32[2,8,128], index: 6, kind: output, shape index: {0}]
  %s7 = inlined_call_operand.hbm [shape: f32[2,8,128], index: 7, kind: output, shape index: {1}]
  %s8 = inlined_call_operand.hbm [shape: f32[2,8,128], index: 8, kind: output, shape index: {2}]
  %9 = xla_tuple %s6, %s7, %s8
  %s10 = sld [smem:[#allocation0]]
  $region123: #{tpu_custom_call.1} parent=0
    _
  %s12 = ssub.s32 1, %s10
  %s13 = scalar_select 0, %s12, %s10
  $region1: #{tpu_custom_call.1} parent=0
    #allocation3 [shape = 'u8[32768]{0}', space=vmem, size = 0x8000, scoped, tag = 'input window, operand 1']
    #allocation4 [shape = 's32[2]{0}', space=sflag, size = 0x8, scoped, tag = 'scoped memory for tpu_custom_call.1']
    #allocation5 [shape = 's32[2]{0}', space=sflag, size = 0x8, scoped, tag = 'scoped memory for tpu_custom_call.1']
    #allocation6 [shape = 'u8[16384]{0}', space=vmem, size = 0x4000, scoped, tag = 'input window, operand 3']
    #allocation7 [shape = 'u8[8192]{0}', space=vmem, size = 0x2000, scoped, tag = 'output window, operand 0']
    #allocation8 [shape = 'u8[8192]{0}', space=vmem, size = 0x2000, scoped, tag = 'output window, operand 1']
    #allocation9 [shape = 's32[2]{0}', space=sflag, size = 0x8, scoped, tag = 'scoped memory for tpu_custom_call.1']
    #allocation10 [shape = 'u8[8192]{0}', space=vmem, size = 0x2000, scoped, tag = 'output window, operand 2']
    %14 = vsyncpa [#allocation4], 0
    %s15 = scalar_lea.sflag [#allocation4], 1
    %16 = vsyncpa %s15, 0
    %17 = vsyncpa [#allocation5], 0
    %s18 = scalar_lea.sflag [#allocation5], 1
    %19 = vsyncpa %s18, 0
    %20 = vsyncpa [#allocation9], 0
    %s21 = scalar_lea.sflag [#allocation9], 1
    %22 = vsyncpa %s21, 0
    loop: start=0, step=1, limit=4
    $region2: #{tpu_custom_call.1} parent=1 // loop_pre_header
      _
    $region3: #{tpu_custom_call.1} parent=1 // loop_header
      %s24 = sphi 0, %s28
      %p25 = scmp.ge.s32.totalorder %s24, 4
      %s31 = sphi 0, %s43
      %s32 = sphi 0, %s39
      %s33 = sphi 0, %s31
      %s34 = sphi 0, %s32
      %s35 = sphi 0, %s33
      %s36 = sphi 0, %s34
      %s44 = sphi 0, %s44
      %s46 = sphi 0, %s44
      %s47 = sphi 0, %s46
      %s61 = sphi 0, %s47
      %s69 = sphi 0, %s71
      %s72 = sphi 0, %s69
      %s73 = sphi 0, %s72
      %s89 = sphi 0, %s73
      %s93 = sphi 0, %s93
      %s95 = sphi 0, %s93
      %s96 = sphi 0, %s95
      %s110 = sphi 0, %s96
      %s118 = sphi 0, %s120
      %s121 = sphi 0, %s118
      %s122 = sphi 0, %s121
      %s138 = sphi 0, %s122
      %s142 = sphi 0, %s142
      %s144 = sphi 0, %s142
      %s145 = sphi 0, %s144
      %s159 = sphi 0, %s145
      %s163 = sphi 0, %s163
      %s165 = sphi 0, %s163
      %s166 = sphi 0, %s165
      %s180 = sphi 0, %s166
      %s186 = sphi 0, %s188
      %s189 = sphi 0, %s186
      %s190 = sphi 0, %s189
      %s206 = sphi 0, %s190
      %s212 = sphi 0, %s214
      %s215 = sphi 0, %s212
      %s216 = sphi 0, %s215
      %s232 = sphi 0, %s216
      %s238 = sphi 0, %s240
      %s241 = sphi 0, %s238
      %s242 = sphi 0, %s241
      %s258 = sphi 0, %s242
    $region4: #{tpu_custom_call.1} parent=1 // loop_header_branch
      %27 = sbr.rel (%p25) target = $region8
    $region5: #{tpu_custom_call.1} parent=1 // loop_body
      %s29 = ssub.s32 %s24, 1
      %s30 = ssub.s32 %s24, 2
      %s37 = sadd.s32 1, %s32
      %p38 = scmp.ge.s32.totalorder %s37, 1
      %s39 = scalar_select %p38, 0, %s37
      %s40 = sadd.s32 1, %s31
      %s41 = scalar_select %p38, %s40, %s31
      %p42 = scmp.ge.s32.totalorder %s41, 2
      %s43 = scalar_select %p42, 0, %s41
      %s45 = sadd.s32 %s44, 1
      %p48 = scmp.eq.s32.totalorder %s24, 1
      %p49 = scmp.ne.s32.totalorder %s44, %s46
      %p50 = scmp.eq.s32.totalorder %s24, 0
      %p51 = por %p49, %p50
      %p52 = scmp.ne.s32.totalorder %s44, %s46
      %p53 = scmp.eq.s32.totalorder %s29, 1
      %p54 = por %p52, %p53
      %p55 = scmp.ne.s32.totalorder %s46, %s47
      %p56 = scmp.eq.s32.totalorder %s29, 0
      %p57 = por %p55, %p56
      %p58 = scmp.ne.s32.totalorder %s46, %s47
      %p59 = scmp.eq.s32.totalorder %s30, 1
      %p60 = por %p58, %p59
      %p62 = scmp.ne.s32.totalorder %s47, %s61
      %p63 = scmp.eq.s32.totalorder %s30, 0
      %p64 = por %p62, %p63
      %s65 = sadd.s32 %s31, %s32
      %s66 = sadd.s32 %s43, %s39
      %s67 = ssub.s32 %s65, %s66
      %p68 = scmp.eq.s32.totalorder %s67, 0
      %s70 = sadd.s32 %s69, 1
      %s71 = scalar_select %p68, %s69, %s70
      %p74 = pneg %p68
      %p75 = scmp.eq.s32.totalorder %s24, 1
      %p76 = por %p74, %p75
      %p77 = scmp.ne.s32.totalorder %s69, %s72
      %p78 = scmp.eq.s32.totalorder %s24, 0
      %p79 = por %p77, %p78
      %p80 = scmp.ne.s32.totalorder %s69, %s72
      %p81 = scmp.eq.s32.totalorder %s29, 1
      %p82 = por %p80, %p81
      %p83 = scmp.ne.s32.totalorder %s72, %s73
      %p84 = scmp.eq.s32.totalorder %s29, 0
      %p85 = por %p83, %p84
      %p86 = scmp.ne.s32.totalorder %s72, %s73
      %p87 = scmp.eq.s32.totalorder %s30, 1
      %p88 = por %p86, %p87
      %p90 = scmp.ne.s32.totalorder %s73, %s89
      %p91 = scmp.eq.s32.totalorder %s30, 0
      %p92 = por %p90, %p91
      %s94 = sadd.s32 %s93, 1
      %p97 = scmp.eq.s32.totalorder %s24, 1
      %p98 = scmp.ne.s32.totalorder %s93, %s95
      %p99 = scmp.eq.s32.totalorder %s24, 0
      %p100 = por %p98, %p99
      %p101 = scmp.ne.s32.totalorder %s93, %s95
      %p102 = scmp.eq.s32.totalorder %s29, 1
      %p103 = por %p101, %p102
      %p104 = scmp.ne.s32.totalorder %s95, %s96
      %p105 = scmp.eq.s32.totalorder %s29, 0
      %p106 = por %p104, %p105
      %p107 = scmp.ne.s32.totalorder %s95, %s96
      %p108 = scmp.eq.s32.totalorder %s30, 1
      %p109 = por %p107, %p108
      %p111 = scmp.ne.s32.totalorder %s96, %s110
      %p112 = scmp.eq.s32.totalorder %s30, 0
      %p113 = por %p111, %p112
      %s114 = sadd.s32 %s31, %s32
      %s115 = sadd.s32 %s43, %s39
      %s116 = ssub.s32 %s114, %s115
      %p117 = scmp.eq.s32.totalorder %s116, 0
      %s119 = sadd.s32 %s118, 1
      %s120 = scalar_select %p117, %s118, %s119
      %p123 = pneg %p117
      %p124 = scmp.eq.s32.totalorder %s24, 1
      %p125 = por %p123, %p124
      %p126 = scmp.ne.s32.totalorder %s118, %s121
      %p127 = scmp.eq.s32.totalorder %s24, 0
      %p128 = por %p126, %p127
      %p129 = scmp.ne.s32.totalorder %s118, %s121
      %p130 = scmp.eq.s32.totalorder %s29, 1
      %p131 = por %p129, %p130
      %p132 = scmp.ne.s32.totalorder %s121, %s122
      %p133 = scmp.eq.s32.totalorder %s29, 0
      %p134 = por %p132, %p133
      %p135 = scmp.ne.s32.totalorder %s121, %s122
      %p136 = scmp.eq.s32.totalorder %s30, 1
      %p137 = por %p135, %p136
      %p139 = scmp.ne.s32.totalorder %s122, %s138
      %p140 = scmp.eq.s32.totalorder %s30, 0
      %p141 = por %p139, %p140
      %s143 = sadd.s32 %s142, 1
      %p146 = scmp.eq.s32.totalorder %s24, 1
      %p147 = scmp.ne.s32.totalorder %s142, %s144
      %p148 = scmp.eq.s32.totalorder %s24, 0
      %p149 = por %p147, %p148
      %p150 = scmp.ne.s32.totalorder %s142, %s144
      %p151 = scmp.eq.s32.totalorder %s29, 1
      %p152 = por %p150, %p151
      %p153 = scmp.ne.s32.totalorder %s144, %s145
      %p154 = scmp.eq.s32.totalorder %s29, 0
      %p155 = por %p153, %p154
      %p156 = scmp.ne.s32.totalorder %s144, %s145
      %p157 = scmp.eq.s32.totalorder %s30, 1
      %p158 = por %p156, %p157
      %p160 = scmp.ne.s32.totalorder %s145, %s159
      %p161 = scmp.eq.s32.totalorder %s30, 0
      %p162 = por %p160, %p161
      %s164 = sadd.s32 %s163, 1
      %p167 = scmp.eq.s32.totalorder %s24, 1
      %p168 = scmp.ne.s32.totalorder %s163, %s165
      %p169 = scmp.eq.s32.totalorder %s24, 0
      %p170 = por %p168, %p169
      %p171 = scmp.ne.s32.totalorder %s163, %s165
      %p172 = scmp.eq.s32.totalorder %s29, 1
      %p173 = por %p171, %p172
      %p174 = scmp.ne.s32.totalorder %s165, %s166
      %p175 = scmp.eq.s32.totalorder %s29, 0
      %p176 = por %p174, %p175
      %p177 = scmp.ne.s32.totalorder %s165, %s166
      %p178 = scmp.eq.s32.totalorder %s30, 1
      %p179 = por %p177, %p178
      %p181 = scmp.ne.s32.totalorder %s166, %s180
      %p182 = scmp.eq.s32.totalorder %s30, 0
      %p183 = por %p181, %p182
      %s184 = ssub.s32 %s31, %s43
      %p185 = scmp.eq.s32.totalorder %s184, 0
      %s187 = sadd.s32 %s186, 1
      %s188 = scalar_select %p185, %s186, %s187
      %p191 = pneg %p185
      %p192 = scmp.eq.s32.totalorder %s24, 1
      %p193 = por %p191, %p192
      %p194 = scmp.ne.s32.totalorder %s186, %s189
      %p195 = scmp.eq.s32.totalorder %s24, 0
      %p196 = por %p194, %p195
      %p197 = scmp.ne.s32.totalorder %s186, %s189
      %p198 = scmp.eq.s32.totalorder %s29, 1
      %p199 = por %p197, %p198
      %p200 = scmp.ne.s32.totalorder %s189, %s190
      %p201 = scmp.eq.s32.totalorder %s29, 0
      %p202 = por %p200, %p201
      %p203 = scmp.ne.s32.totalorder %s189, %s190
      %p204 = scmp.eq.s32.totalorder %s30, 1
      %p205 = por %p203, %p204
      %p207 = scmp.ne.s32.totalorder %s190, %s206
      %p208 = scmp.eq.s32.totalorder %s30, 0
      %p209 = por %p207, %p208
      %s210 = ssub.s32 %s31, %s43
      %p211 = scmp.eq.s32.totalorder %s210, 0
      %s213 = sadd.s32 %s212, 1
      %s214 = scalar_select %p211, %s212, %s213
      %p217 = pneg %p211
      %p218 = scmp.eq.s32.totalorder %s24, 1
      %p219 = por %p217, %p218
      %p220 = scmp.ne.s32.totalorder %s212, %s215
      %p221 = scmp.eq.s32.totalorder %s24, 0
      %p222 = por %p220, %p221
      %p223 = scmp.ne.s32.totalorder %s212, %s215
      %p224 = scmp.eq.s32.totalorder %s29, 1
      %p225 = por %p223, %p224
      %p226 = scmp.ne.s32.totalorder %s215, %s216
      %p227 = scmp.eq.s32.totalorder %s29, 0
      %p228 = por %p226, %p227
      %p229 = scmp.ne.s32.totalorder %s215, %s216
      %p230 = scmp.eq.s32.totalorder %s30, 1
      %p231 = por %p229, %p230
      %p233 = scmp.ne.s32.totalorder %s216, %s232
      %p234 = scmp.eq.s32.totalorder %s30, 0
      %p235 = por %p233, %p234
      %s236 = ssub.s32 %s31, %s43
      %p237 = scmp.eq.s32.totalorder %s236, 0
      %s239 = sadd.s32 %s238, 1
      %s240 = scalar_select %p237, %s238, %s239
      %p243 = pneg %p237
      %p244 = scmp.eq.s32.totalorder %s24, 1
      %p245 = por %p243, %p244
      %p246 = scmp.ne.s32.totalorder %s238, %s241
      %p247 = scmp.eq.s32.totalorder %s24, 0
      %p248 = por %p246, %p247
      %p249 = scmp.ne.s32.totalorder %s238, %s241
      %p250 = scmp.eq.s32.totalorder %s29, 1
      %p251 = por %p249, %p250
      %p252 = scmp.ne.s32.totalorder %s241, %s242
      %p253 = scmp.eq.s32.totalorder %s29, 0
      %p254 = por %p252, %p253
      %p255 = scmp.ne.s32.totalorder %s241, %s242
      %p256 = scmp.eq.s32.totalorder %s30, 1
      %p257 = por %p255, %p256
      %p259 = scmp.ne.s32.totalorder %s242, %s258
      %p260 = scmp.eq.s32.totalorder %s30, 0
      %p261 = por %p259, %p260
      %p262 = scmp.le.s32.totalorder 1, %s24
      %p263 = scmp.lt.s32.totalorder %s24, 3
      %p264 = pnand %p262, %p263
      %p265 = pneg %p264
      // Predicated region
      $region9: #{tpu_custom_call.1} parent=5 // pred_check
        _
      $region10: #{tpu_custom_call.1} parent=5 // pred_check_branch
        %267 = sbr.rel (%p264) target = $region12
      $region11: #{tpu_custom_call.1} parent=5 // pred_region
        %s268 = ssub.s32 %s24, 1
        // Predicated region
        $region13: #{tpu_custom_call.1} parent=11 // pred_check
          %p269 = pneg %p57
        $region14: #{tpu_custom_call.1} parent=11 // pred_check_branch
          %271 = sbr.rel (%p269) target = $region16
        $region15: #{tpu_custom_call.1} parent=11 // pred_region
          _
        $region16: #{tpu_custom_call.1} parent=11 // pred_fallthru
          _
        // Predicated region
        $region17: #{tpu_custom_call.1} parent=11 // pred_check
          %p272 = pneg %p106
        $region18: #{tpu_custom_call.1} parent=11 // pred_check_branch
          %274 = sbr.rel (%p272) target = $region20
        $region19: #{tpu_custom_call.1} parent=11 // pred_region
          _
        $region20: #{tpu_custom_call.1} parent=11 // pred_fallthru
          _
        // Predicated region
        $region21: #{tpu_custom_call.1} parent=11 // pred_check
          %p275 = pneg %p155
        $region22: #{tpu_custom_call.1} parent=11 // pred_check_branch
          %277 = sbr.rel (%p275) target = $region24
        $region23: #{tpu_custom_call.1} parent=11 // pred_region
          _
        $region24: #{tpu_custom_call.1} parent=11 // pred_fallthru
          _
        // Predicated region
        $region25: #{tpu_custom_call.1} parent=11 // pred_check
          %p278 = pneg %p176
        $region26: #{tpu_custom_call.1} parent=11 // pred_check_branch
          %280 = sbr.rel (%p278) target = $region28
        $region27: #{tpu_custom_call.1} parent=11 // pred_region
          _
        $region28: #{tpu_custom_call.1} parent=11 // pred_fallthru
          _
      $region12: #{tpu_custom_call.1} parent=5 // pred_fallthru
        _
      %p281 = scmp.lt.s32.totalorder %s24, 2
      // Predicated region
      $region29: #{tpu_custom_call.1} parent=5 // pred_check
        %p282 = pneg %p281
      $region30: #{tpu_custom_call.1} parent=5 // pred_check_branch
        %284 = sbr.rel (%p282) target = $region32
      $region31: #{tpu_custom_call.1} parent=5 // pred_region
        // Predicated region
        $region33: #{tpu_custom_call.1} parent=31 // pred_check
          %p285 = pneg %p79
        $region34: #{tpu_custom_call.1} parent=31 // pred_check_branch
          %287 = sbr.rel (%p285) target = $region36
        $region35: #{tpu_custom_call.1} parent=31 // pred_region
          %s288 = sand.u32 %s69, 1
          %s289 = scalar_lea.sflag [#allocation4], %s288
          %s290 = sand.u32 %s69, 1
          %s291 = smul.addr %s290, 32
          %s292 = scalar_lea.vmem [#allocation3], %s291
          %s293 = sadd.s32 %s31, %s32
          %s295 = ssub.s32 512, 512
          %296 = vsyncadd %s289, %s295
          %s297 = smul.addr %s293, 128
          %s298 = scalar_lea.hbm %s1, %s297
          %s299 = sshll.u32 %s292, 4
          %s300 = int_to_ptr.vmem [resolvable:$true] %s299
          %305 = dma.hbm_to_vmem [thread:$0]  %s298, 512, %s300, %s289, 256, 128, 8
        $region36: #{tpu_custom_call.1} parent=31 // pred_fallthru
          _
        // Predicated region
        $region37: #{tpu_custom_call.1} parent=31 // pred_check
          %p306 = pneg %p128
        $region38: #{tpu_custom_call.1} parent=31 // pred_check_branch
          %308 = sbr.rel (%p306) target = $region40
        $region39: #{tpu_custom_call.1} parent=31 // pred_region
          %s309 = sand.u32 %s118, 1
          %s310 = sand.u32 %s118, 1
          %s311 = smul.addr %s310, 16
          %s312 = scalar_lea.vmem [#allocation6], %s311
          %s313 = sadd.s32 %s31, %s32
          %s314 = smul.addr %s313, 8
          %s315 = scalar_lea.vmem %s3, %s314
          // Predicated region
          $region41: #{tpu_custom_call.1} parent=39 // pred_check
            _
          $region42: #{tpu_custom_call.1} parent=39 // pred_check_branch
            %317 = sbr.rel (0) target = $region44
          $region43: #{tpu_custom_call.1} parent=39 // pred_region
            // Predicated region
            $region45: #{tpu_custom_call.1} parent=43 // pred_check
              _
            $region46: #{tpu_custom_call.1} parent=43 // pred_check_branch
              %319 = sbr.rel (0) target = $region48
            $region47: #{tpu_custom_call.1} parent=43 // pred_region
              // Predicated region
              $region60: #{tpu_custom_call.1} parent=47 // pred_check
                _
              $region61: #{tpu_custom_call.1} parent=47 // pred_check_branch
                %336 = sbr.rel (0) target = $region63
              $region62: #{tpu_custom_call.1} parent=47 // pred_region
                loop: start=0, step=1, limit=1
                $region64: #{tpu_custom_call.1} parent=62 // loop_pre_header
                  _
                $region65: #{tpu_custom_call.1} parent=62 // loop_header
                  %s338 = sphi 0, %s342
                  %p339 = scmp.ge.s32.totalorder %s338, 1
                  %s343 = sphi %s315, %s315
                  %s344 = sphi %s312, %s312
                $region66: #{tpu_custom_call.1} parent=62 // loop_header_branch
                  %341 = sbr.rel (%p339) target = $region70
                $region67: #{tpu_custom_call.1} parent=62 // loop_body
                  %v345 = vld [vmem:[%s343] sm:$0xff]
                  %346 = vst [vmem:[%s344] sm:$0xff] %v345
                  %v347 = vld [vmem:[%s343 + $0x10] sm:$0xff]
                  %348 = vst [vmem:[%s344 + $0x8] sm:$0xff] %v347
                $region68: #{tpu_custom_call.1} parent=62 // loop_footer
                  %s342 = sadd.s32 1, %s338
                $region69: #{tpu_custom_call.1} parent=62 // loop_footer_branch
                  %337 = sbr.rel target = $region65
                $region70: #{tpu_custom_call.1} parent=62 // loop_exit
                  _
              $region63: #{tpu_custom_call.1} parent=47 // pred_fallthru
                _
              // Predicated region
              $region71: #{tpu_custom_call.1} parent=47 // pred_check
                _
              $region72: #{tpu_custom_call.1} parent=47 // pred_check_branch
                %350 = sbr.rel target = $region74
              $region73: #{tpu_custom_call.1} parent=47 // pred_region
                _
              $region74: #{tpu_custom_call.1} parent=47 // pred_fallthru
                _
            $region48: #{tpu_custom_call.1} parent=43 // pred_fallthru
              _
            // Predicated region
            $region49: #{tpu_custom_call.1} parent=43 // pred_check
              _
            $region50: #{tpu_custom_call.1} parent=43 // pred_check_branch
              %321 = sbr.rel target = $region52
            $region51: #{tpu_custom_call.1} parent=43 // pred_region
              loop: start=0, step=1, limit=1
              $region53: #{tpu_custom_call.1} parent=51 // loop_pre_header
                _
              $region54: #{tpu_custom_call.1} parent=51 // loop_header
                %s324 = sphi 0, %s328
                %p325 = scmp.ge.s32.totalorder %s324, 1
                %s329 = sphi %s315, %s315
                %s330 = sphi %s312, %s312
              $region55: #{tpu_custom_call.1} parent=51 // loop_header_branch
                %327 = sbr.rel (%p325) target = $region59
              $region56: #{tpu_custom_call.1} parent=51 // loop_body
                %v331 = vld [vmem:[%s329] sm:$0xff]
                %332 = vst [vmem:[%s330] sm:$0xff] %v331
                %v333 = vld [vmem:[%s329 + $0x10] sm:$0xff]
                %334 = vst [vmem:[%s330 + $0x8] sm:$0xff] %v333
              $region57: #{tpu_custom_call.1} parent=51 // loop_footer
                %s328 = sadd.s32 1, %s324
              $region58: #{tpu_custom_call.1} parent=51 // loop_footer_branch
                %323 = sbr.rel target = $region54
              $region59: #{tpu_custom_call.1} parent=51 // loop_exit
                _
            $region52: #{tpu_custom_call.1} parent=43 // pred_fallthru
              _
          $region44: #{tpu_custom_call.1} parent=39 // pred_fallthru
            _
          %351 = vnop
        $region40: #{tpu_custom_call.1} parent=31 // pred_fallthru
          _
      $region32: #{tpu_custom_call.1} parent=5 // pred_fallthru
        _
      %p352 = scmp.le.s32.totalorder 1, %s24
      %p353 = scmp.lt.s32.totalorder %s24, 3
      %p354 = pnand %p352, %p353
      %p355 = pneg %p354
      // Predicated region
      $region75: #{tpu_custom_call.1} parent=5 // pred_check
        _
      $region76: #{tpu_custom_call.1} parent=5 // pred_check_branch
        %357 = sbr.rel (%p354) target = $region78
      $region77: #{tpu_custom_call.1} parent=5 // pred_region
        %s358 = ssub.s32 %s24, 1
        %s359 = sand.u32 %s72, 1
        %s360 = scalar_lea.sflag [#allocation4], %s359
        %s361 = sand.u32 %s72, 1
        %s362 = smul.addr %s361, 32
        %s363 = scalar_lea.vmem [#allocation3], %s362
        // Predicated region
        $region79: #{tpu_custom_call.1} parent=77 // pred_check
          %p364 = pneg %p85
        $region80: #{tpu_custom_call.1} parent=77 // pred_check_branch
          %366 = sbr.rel (%p364) target = $region82
        $region81: #{tpu_custom_call.1} parent=77 // pred_region
          %367 = dma.done %s360, 512
        $region82: #{tpu_custom_call.1} parent=77 // pred_fallthru
          _
        %s368 = sand.u32 %s121, 1
        %s369 = sand.u32 %s121, 1
        %s370 = smul.addr %s369, 16
        %s371 = scalar_lea.vmem [#allocation6], %s370
        // Predicated region
        $region83: #{tpu_custom_call.1} parent=77 // pred_check
          %p372 = pneg %p134
        $region84: #{tpu_custom_call.1} parent=77 // pred_check_branch
          %374 = sbr.rel (%p372) target = $region86
        $region85: #{tpu_custom_call.1} parent=77 // pred_region
          _
        $region86: #{tpu_custom_call.1} parent=77 // pred_fallthru
          _
        %p375 = pneg %p57
        %p376 = pneg %p54
        %s377 = sand.u32 %s72, 1
        %s378 = scalar_lea.sflag [#allocation4], %s377
        %s379 = sand.u32 %s72, 1
        %s380 = smul.addr %s379, 32
        %s381 = scalar_lea.vmem [#allocation3], %s380
        %p382 = pneg %p85
        %p383 = pneg %p82
        %p384 = pneg %p106
        %p385 = pneg %p103
        %s386 = sand.u32 %s121, 1
        %s387 = sand.u32 %s121, 1
        %s388 = smul.addr %s387, 16
        %s389 = scalar_lea.vmem [#allocation6], %s388
        %p390 = pneg %p134
        %p391 = pneg %p131
        %p392 = pneg %p155
        %p393 = pneg %p152
        %p394 = pneg %p176
        %p395 = pneg %p173
        %p396 = pneg %p202
        %p397 = pneg %p199
        %s398 = sand.u32 %s189, 1
        %s399 = scalar_lea.sflag [#allocation5], %s398
        %s400 = sand.u32 %s189, 1
        %s401 = smul.addr %s400, 8
        %s402 = scalar_lea.vmem [#allocation7], %s401
        %p403 = pneg %p228
        %p404 = pneg %p225
        %s405 = sand.u32 %s29, 1
        %s406 = scalar_lea.sflag [#allocation9], %s405
        %s407 = sand.u32 %s215, 1
        %s408 = smul.addr %s407, 8
        %s409 = scalar_lea.vmem [#allocation8], %s408
        %p410 = pneg %p254
        %p411 = pneg %p251
        %s412 = sand.u32 %s29, 1
        %s413 = scalar_lea.sflag [#allocation9], %s412
        %s414 = sand.u32 %s241, 1
        %s415 = smul.addr %s414, 8
        %s416 = scalar_lea.vmem [#allocation10], %s415
        %s417 = sadd.s32 %s33, %s34
        %s418 = sadd.s32 %s33, %s34
        %p419 = scmp.eq.s32.totalorder %s34, 0
        // Predicated region
        $region87: #{tpu_custom_call.1} parent=77 // pred_check
          %p420 = pneg %p419
        $region88: #{tpu_custom_call.1} parent=77 // pred_check_branch
          %422 = sbr.rel (%p420) target = $region90
        $region89: #{tpu_custom_call.1} parent=77 // pred_region
          %423 = vst [vmem:[#allocation2] sm:$0xff] 0.0
        $region90: #{tpu_custom_call.1} parent=77 // pred_fallthru
          _
        %v424 = vld [vmem:[%s0] sm:$0xff]
        %v425 = vld [vmem:[%s363] sm:$0xff]
        %v426 = vld [vmem:[%s363 + $0x8] sm:$0xff]
        %v427 = vld [vmem:[%s363 + $0x10] sm:$0xff]
        %v428 = vld [vmem:[%s363 + $0x18] sm:$0xff]
        %vm429 = vcmask 261120
        %v431 = vsel %vm429, %v424, 0
        %433 = vmatprep.subr.mxu0 0.0
        %434 = vmatpush1.msra.mxu0 %v425
        %435 = vmatprep.subr.mxu0 0.0
        %436 = vmatpush1.msra.mxu0 %v426
        %437 = vmatprep.subr.mxu0 0.0
        %438 = vmatpush1.msra.mxu0 %v427
        %439 = vmatprep.subr.mxu0 0.0
        %440 = vmatpush1.msra.mxu0 %v428
        %441 = vmatprep.subr.mxu0 0.0
        %442 = vmatpush1.msra.mxu0 0.0
        %443 = vmatprep.subr.mxu0 0.0
        %444 = vmatpush1.msra.mxu0 0.0
        %445 = vmatprep.subr.mxu0 0.0
        %446 = vmatpush1.msra.mxu0 0.0
        %447 = vmatprep.subr.mxu0 0.0
        %448 = vmatpush1.msra.mxu0 0.0
        %449 = vmatprep.subr.mxu0 0.0
        %450 = vmatpush1.msra.mxu0 0.0
        %451 = vmatprep.subr.mxu0 0.0
        %452 = vmatpush1.msra.mxu0 0.0
        %453 = vmatprep.subr.mxu0 0.0
        %454 = vmatpush1.msra.mxu0 0.0
        %455 = vmatprep.subr.mxu0 0.0
        %456 = vmatpush1.msra.mxu0 0.0
        %457 = vmatprep.subr.mxu0 0.0
        %458 = vmatpush1.msra.mxu0 0.0
        %459 = vmatprep.subr.mxu0 0.0
        %460 = vmatpush1.msra.mxu0 0.0
        %461 = vmatprep.subr.mxu0 0.0
        %462 = vmatpush1.msra.mxu0 0.0
        %463 = vmatprep.subr.mxu0 0.0
        %464 = vmatpush1.msra.mxu0 0.0
        %465 = vmatprep.subr.mxu0 0.0
        %466 = vmatpush1.msra.mxu0 0.0
        %467 = vmatprep.subr.mxu0 0.0
        %468 = vmatpush1.msra.mxu0 0.0
        %469 = vmatprep.subr.mxu0 0.0
        %470 = vmatpush1.msra.mxu0 0.0
        %471 = vmatprep.subr.mxu0 0.0
        %472 = vmatpush1.msra.mxu0 0.0
        %473 = vmatprep.subr.mxu0 0.0
        %474 = vmatpush1.msra.mxu0 0.0
        %475 = vmatprep.subr.mxu0 0.0
        %476 = vmatpush1.msra.mxu0 0.0
        %477 = vmatprep.subr.mxu0 0.0
        %478 = vmatpush1.msra.mxu0 0.0
        %479 = vmatprep.subr.mxu0 0.0
        %480 = vmatpush1.msra.mxu0 0.0
        %481 = vmatprep.subr.mxu0 0.0
        %482 = vmatpush1.msra.mxu0 0.0
        %483 = vmatprep.subr.mxu0 0.0
        %484 = vmatpush1.msra.mxu0 0.0
        %485 = vmatprep.subr.mxu0 0.0
        %486 = vmatpush1.msra.mxu0 0.0
        %487 = vmatprep.subr.mxu0 0.0
        %488 = vmatpush1.msra.mxu0 0.0
        %489 = vmatprep.subr.mxu0 0.0
        %490 = vmatpush1.msra.mxu0 0.0
        %491 = vmatprep.subr.mxu0 0.0
        %492 = vmatpush1.msra.mxu0 0.0
        %493 = vmatprep.subr.mxu0 0.0
        %494 = vmatpush1.msra.mxu0 0.0
        %495 = vmatprep.subr.mxu0 0.0
        %496 = vmatpush1.msra.mxu0 0.0
        %497 = vmatprep.mubr.f32.mxu0 0.0
        %498 = vmatmul.mubr.f32.gmra.mrb[0].mxu0 %v431
        %v499 = vpop.f32.mrb[0].mxu0
        %v500 = vadd.f32 0.0, %v499
        %v501 = vpop.f32.mrb[0].mxu0
        %502 = vdwg.mxu0
        %v503 = vmul.f32 %v500, 0.5
        %v504 = vld [vmem:[%s2] sm:$0xff]
        %v505 = vld [vmem:[%s371] sm:$0xff]
        %v506 = vld [vmem:[%s371 + $0x8] sm:$0xff]
        %vm507 = vcmask 130048
        %v509 = vsel %vm507, %v504, 0
        %511 = vmatprep.subr.mxu0 0.0
        %512 = vmatpush1.msra.mxu0 %v505
        %513 = vmatprep.subr.mxu0 0.0
        %514 = vmatpush1.msra.mxu0 %v506
        %515 = vmatprep.subr.mxu0 0.0
        %516 = vmatpush1.msra.mxu0 0.0
        %517 = vmatprep.subr.mxu0 0.0
        %518 = vmatpush1.msra.mxu0 0.0
        %519 = vmatprep.subr.mxu0 0.0
        %520 = vmatpush1.msra.mxu0 0.0
        %521 = vmatprep.subr.mxu0 0.0
        %522 = vmatpush1.msra.mxu0 0.0
        %523 = vmatprep.subr.mxu0 0.0
        %524 = vmatpush1.msra.mxu0 0.0
        %525 = vmatprep.subr.mxu0 0.0
        %526 = vmatpush1.msra.mxu0 0.0
        %527 = vmatprep.subr.mxu0 0.0
        %528 = vmatpush1.msra.mxu0 0.0
        %529 = vmatprep.subr.mxu0 0.0
        %530 = vmatpush1.msra.mxu0 0.0
        %531 = vmatprep.subr.mxu0 0.0
        %532 = vmatpush1.msra.mxu0 0.0
        %533 = vmatprep.subr.mxu0 0.0
        %534 = vmatpush1.msra.mxu0 0.0
        %535 = vmatprep.subr.mxu0 0.0
        %536 = vmatpush1.msra.mxu0 0.0
        %537 = vmatprep.subr.mxu0 0.0
        %538 = vmatpush1.msra.mxu0 0.0
        %539 = vmatprep.subr.mxu0 0.0
        %540 = vmatpush1.msra.mxu0 0.0
        %541 = vmatprep.subr.mxu0 0.0
        %542 = vmatpush1.msra.mxu0 0.0
        %543 = vmatprep.subr.mxu0 0.0
        %544 = vmatpush1.msra.mxu0 0.0
        %545 = vmatprep.subr.mxu0 0.0
        %546 = vmatpush1.msra.mxu0 0.0
        %547 = vmatprep.subr.mxu0 0.0
        %548 = vmatpush1.msra.mxu0 0.0
        %549 = vmatprep.subr.mxu0 0.0
        %550 = vmatpush1.msra.mxu0 0.0
        %551 = vmatprep.subr.mxu0 0.0
        %552 = vmatpush1.msra.mxu0 0.0
        %553 = vmatprep.subr.mxu0 0.0
        %554 = vmatpush1.msra.mxu0 0.0
        %555 = vmatprep.subr.mxu0 0.0
        %556 = vmatpush1.msra.mxu0 0.0
        %557 = vmatprep.subr.mxu0 0.0
        %558 = vmatpush1.msra.mxu0 0.0
        %559 = vmatprep.subr.mxu0 0.0
        %560 = vmatpush1.msra.mxu0 0.0
        %561 = vmatprep.subr.mxu0 0.0
        %562 = vmatpush1.msra.mxu0 0.0
        %563 = vmatprep.subr.mxu0 0.0
        %564 = vmatpush1.msra.mxu0 0.0
        %565 = vmatprep.subr.mxu0 0.0
        %566 = vmatpush1.msra.mxu0 0.0
        %567 = vmatprep.subr.mxu0 0.0
        %568 = vmatpush1.msra.mxu0 0.0
        %569 = vmatprep.subr.mxu0 0.0
        %570 = vmatpush1.msra.mxu0 0.0
        %571 = vmatprep.subr.mxu0 0.0
        %572 = vmatpush1.msra.mxu0 0.0
        %573 = vmatprep.subr.mxu0 0.0
        %574 = vmatpush1.msra.mxu0 0.0
        %575 = vmatprep.mubr.f32.mxu0 0.0
        %576 = vmatmul.mubr.f32.gmra.mrb[0].mxu0 %v509
        %v577 = vpop.f32.mrb[0].mxu0
        %v578 = vadd.f32 0.0, %v577
        %v579 = vpop.f32.mrb[0].mxu0
        %580 = vdwg.mxu0
        %v581 = vand.u32 2147483647, %v503
        %v582 = vsub.f32 0.0, %v581
        %v583 = vmul.f32 %v582, 1.442695
        %v584 = vpow.pop %v583
        %v585 = vadd.f32 %v584, 1.0
        %v586 = vlog2.pop %v585
        %v587 = vmul.f32 %v586, 0.6931472
        %v588 = vmul.f32 -0.5, %v584
        %v589 = vadd.f32 %v588, 1.0
        %v590 = vmul.f32 %v589, %v584
        %v591 = vand.u32 2147483647, %v584
        %vm592 = vcmp.lt.f32.partialorder %v591, 0.0004427343
        %v593 = vsel %vm592, %v590, %v587
        %v594 = vmax.f32 %v503, 0.0
        %v595 = vadd.f32 %v593, %v594
        %vm596 = vcmp.gt.f32.partialorder %v578, 0.0
        %v597 = vsel %vm596, %v503, 0.0
        %v598 = vsub.f32 %v595, %v597
        %s599 = sadd.s32 %s33, %s34
        %s600 = smul.u32 %s599, 128
        %v601 = vlaneseq
        %v602 = vand.u32 %v601, 127
        %v603 = vstv %s600
        %v604 = vadd.s32 %v603, %v602
        %vm605 = vcmp.lt.s32.totalorder %v604, 256
        %v606 = vsel %vm605, %v598, 0.0
        %v607 = vld [vmem:[#allocation2] sm:$0xff]
        %v608 = vadd.f32 %v607, %v606
        %609 = vst [vmem:[#allocation2] sm:$0xff] %v608
        // Predicated region
        $region91: #{tpu_custom_call.1} parent=77 // pred_check
          %p610 = pneg %p419
        $region92: #{tpu_custom_call.1} parent=77 // pred_check_branch
          %612 = sbr.rel (%p610) target = $region94
        $region93: #{tpu_custom_call.1} parent=77 // pred_region
          %v613 = vld [vmem:[#allocation2] sm:$0xff]
          %614 = vadd.xlane.f32.xlu0 %v613
          %v615 = vpop.xlane.xlu0 %614
          %v616 = vrot.slane %v615, 4
          %v617 = vadd.f32 %v615, %v616
          %v618 = vrot.slane %v617, 2
          %v619 = vadd.f32 %v617, %v618
          %v620 = vrot.slane %v619, 1
          %v621 = vadd.f32 %v619, %v620
          %s622 = vtos %v621
          %v623 = vstv %s622
          %624 = vst [vmem:[%s402] sm:$0xff] %v623
          %v625 = vld [vmem:[%s5] sm:$0xff]
          %v626 = vld [vmem:[%s4] sm:$0xff]
          %v627 = vld [vmem:[%s4 + $0x8] sm:$0xff]
          %v628 = vld [vmem:[%s4 + $0x10] sm:$0xff]
          %v629 = vld [vmem:[%s4 + $0x18] sm:$0xff]
          %v631 = vsel %vm429, %v625, 0
          %633 = vmatprep.subr.mxu0 0.0
          %634 = vmatpush1.msra.mxu0 %v626
          %635 = vmatprep.subr.mxu0 0.0
          %636 = vmatpush1.msra.mxu0 %v627
          %637 = vmatprep.subr.mxu0 0.0
          %638 = vmatpush1.msra.mxu0 %v628
          %639 = vmatprep.subr.mxu0 0.0
          %640 = vmatpush1.msra.mxu0 %v629
          %641 = vmatprep.subr.mxu0 0.0
          %642 = vmatpush1.msra.mxu0 0.0
          %643 = vmatprep.subr.mxu0 0.0
          %644 = vmatpush1.msra.mxu0 0.0
          %645 = vmatprep.subr.mxu0 0.0
          %646 = vmatpush1.msra.mxu0 0.0
          %647 = vmatprep.subr.mxu0 0.0
          %648 = vmatpush1.msra.mxu0 0.0
          %649 = vmatprep.subr.mxu0 0.0
          %650 = vmatpush1.msra.mxu0 0.0
          %651 = vmatprep.subr.mxu0 0.0
          %652 = vmatpush1.msra.mxu0 0.0
          %653 = vmatprep.subr.mxu0 0.0
          %654 = vmatpush1.msra.mxu0 0.0
          %655 = vmatprep.subr.mxu0 0.0
          %656 = vmatpush1.msra.mxu0 0.0
          %657 = vmatprep.subr.mxu0 0.0
          %658 = vmatpush1.msra.mxu0 0.0
          %659 = vmatprep.subr.mxu0 0.0
          %660 = vmatpush1.msra.mxu0 0.0
          %661 = vmatprep.subr.mxu0 0.0
          %662 = vmatpush1.msra.mxu0 0.0
          %663 = vmatprep.subr.mxu0 0.0
          %664 = vmatpush1.msra.mxu0 0.0
          %665 = vmatprep.subr.mxu0 0.0
          %666 = vmatpush1.msra.mxu0 0.0
          %667 = vmatprep.subr.mxu0 0.0
          %668 = vmatpush1.msra.mxu0 0.0
          %669 = vmatprep.subr.mxu0 0.0
          %670 = vmatpush1.msra.mxu0 0.0
          %671 = vmatprep.subr.mxu0 0.0
          %672 = vmatpush1.msra.mxu0 0.0
          %673 = vmatprep.subr.mxu0 0.0
          %674 = vmatpush1.msra.mxu0 0.0
          %675 = vmatprep.subr.mxu0 0.0
          %676 = vmatpush1.msra.mxu0 0.0
          %677 = vmatprep.subr.mxu0 0.0
          %678 = vmatpush1.msra.mxu0 0.0
          %679 = vmatprep.subr.mxu0 0.0
          %680 = vmatpush1.msra.mxu0 0.0
          %681 = vmatprep.subr.mxu0 0.0
          %682 = vmatpush1.msra.mxu0 0.0
          %683 = vmatprep.subr.mxu0 0.0
          %684 = vmatpush1.msra.mxu0 0.0
          %685 = vmatprep.subr.mxu0 0.0
          %686 = vmatpush1.msra.mxu0 0.0
          %687 = vmatprep.subr.mxu0 0.0
          %688 = vmatpush1.msra.mxu0 0.0
          %689 = vmatprep.subr.mxu0 0.0
          %690 = vmatpush1.msra.mxu0 0.0
          %691 = vmatprep.subr.mxu0 0.0
          %692 = vmatpush1.msra.mxu0 0.0
          %693 = vmatprep.subr.mxu0 0.0
          %694 = vmatpush1.msra.mxu0 0.0
          %695 = vmatprep.subr.mxu0 0.0
          %696 = vmatpush1.msra.mxu0 0.0
          %697 = vmatprep.mubr.f32.mxu0 0.0
          %698 = vmatmul.mubr.f32.gmra.mrb[0].mxu0 %v631
          %v699 = vpop.f32.mrb[0].mxu0
          %v700 = vadd.f32 0.0, %v699
          %v701 = vpop.f32.mrb[0].mxu0
          %702 = vdwg.mxu0
          %v703 = vld [vmem:[%s2] sm:$0xff]
          %v704 = vsub.f32 %v703, %v700
          %v705 = vmul.f32 %v704, %v704
          %v706 = vsel %vm507, %v705, 0.0
          %707 = vadd.xlane.f32.xlu0 %v706
          %v708 = vpop.xlane.xlu0 %707
          %v709 = vrot.slane %v708, 4
          %v710 = vadd.f32 %v708, %v709
          %v711 = vrot.slane %v710, 2
          %v712 = vadd.f32 %v710, %v711
          %v713 = vrot.slane %v712, 1
          %v714 = vadd.f32 %v712, %v713
          %s715 = vtos %v714
          %v716 = vstv %s715
          %717 = vst [vmem:[%s409] sm:$0xff] %v716
          %v718 = vld [vmem:[%s4] sm:$0xff]
          %v719 = vld [vmem:[%s4 + $0x8] sm:$0xff]
          %v720 = vld [vmem:[%s4 + $0x10] sm:$0xff]
          %v721 = vld [vmem:[%s4 + $0x18] sm:$0xff]
          %v722 = vmul.f32 %v718, %v718
          %v723 = vmul.f32 %v719, %v719
          %v724 = vmul.f32 %v720, %v720
          %v725 = vmul.f32 %v721, %v721
          %v726 = vsel %vm507, %v722, 0.0
          %v727 = vsel %vm507, %v723, 0.0
          %v728 = vadd.f32 %v726, %v727
          %v729 = vsel %vm507, %v724, 0.0
          %v730 = vadd.f32 %v728, %v729
          %v731 = vsel %vm507, %v725, 0.0
          %v732 = vadd.f32 %v730, %v731
          %733 = vadd.xlane.f32.xlu0 %v732
          %v734 = vpop.xlane.xlu0 %733
          %v735 = vrot.slane %v734, 4
          %v736 = vadd.f32 %v734, %v735
          %v737 = vrot.slane %v736, 2
          %v738 = vadd.f32 %v736, %v737
          %v739 = vrot.slane %v738, 1
          %v740 = vadd.f32 %v738, %v739
          %s741 = vtos %v740
          %v742 = vstv %s741
          %743 = vst [vmem:[%s416] sm:$0xff] %v742
        $region94: #{tpu_custom_call.1} parent=77 // pred_fallthru
          _
        %s744 = sand.u32 %s189, 1
        %s745 = scalar_lea.sflag [#allocation5], %s744
        %s746 = sand.u32 %s189, 1
        %s747 = smul.addr %s746, 8
        %s748 = scalar_lea.vmem [#allocation7], %s747
        %s749 = sand.u32 %s29, 1
        %s750 = scalar_lea.sflag [#allocation9], %s749
        %s751 = sand.u32 %s215, 1
        %s752 = smul.addr %s751, 8
        %s753 = scalar_lea.vmem [#allocation8], %s752
        %s754 = sand.u32 %s29, 1
        %s755 = scalar_lea.sflag [#allocation9], %s754
        %s756 = sand.u32 %s241, 1
        %s757 = smul.addr %s756, 8
        %s758 = scalar_lea.vmem [#allocation10], %s757
        // Predicated region
        $region95: #{tpu_custom_call.1} parent=77 // pred_check
          %p759 = pneg %p199
        $region96: #{tpu_custom_call.1} parent=77 // pred_check_branch
          %761 = sbr.rel (%p759) target = $region98
        $region97: #{tpu_custom_call.1} parent=77 // pred_region
          %s763 = ssub.s32 128, 128
          %764 = vsyncadd %s745, %s763
          %s765 = smul.addr %s33, 128
          %s766 = scalar_lea.hbm %s6, %s765
          %s768 = sshll.u32 %s748, 4
          %s769 = int_to_ptr.vmem [resolvable:$true] %s768
          %771 = dma.vmem_to_hbm [thread:$0]  %s769, 128, %s766, %s745
        $region98: #{tpu_custom_call.1} parent=77 // pred_fallthru
          _
        // Predicated region
        $region99: #{tpu_custom_call.1} parent=77 // pred_check
          %p772 = pneg %p225
        $region100: #{tpu_custom_call.1} parent=77 // pred_check_branch
          %774 = sbr.rel (%p772) target = $region102
        $region101: #{tpu_custom_call.1} parent=77 // pred_region
          %s776 = ssub.s32 128, 128
          %777 = vsyncadd %s750, %s776
          %s778 = smul.addr %s33, 128
          %s779 = scalar_lea.hbm %s7, %s778
          %s781 = sshll.u32 %s753, 4
          %s782 = int_to_ptr.vmem [resolvable:$true] %s781
          %784 = dma.vmem_to_hbm [thread:$0]  %s782, 128, %s779, %s750
        $region102: #{tpu_custom_call.1} parent=77 // pred_fallthru
          _
        // Predicated region
        $region103: #{tpu_custom_call.1} parent=77 // pred_check
          %p785 = pneg %p251
        $region104: #{tpu_custom_call.1} parent=77 // pred_check_branch
          %787 = sbr.rel (%p785) target = $region106
        $region105: #{tpu_custom_call.1} parent=77 // pred_region
          %s789 = ssub.s32 128, 128
          %790 = vsyncadd %s755, %s789
          %s791 = smul.addr %s33, 128
          %s792 = scalar_lea.hbm %s8, %s791
          %s794 = sshll.u32 %s758, 4
          %s795 = int_to_ptr.vmem [resolvable:$true] %s794
          %797 = dma.vmem_to_hbm [thread:$0]  %s795, 128, %s792, %s755
        $region106: #{tpu_custom_call.1} parent=77 // pred_fallthru
          _
      $region78: #{tpu_custom_call.1} parent=5 // pred_fallthru
        _
      %p798 = scmp.le.s32.totalorder 2, %s24
      // Predicated region
      $region107: #{tpu_custom_call.1} parent=5 // pred_check
        %p799 = pneg %p798
      $region108: #{tpu_custom_call.1} parent=5 // pred_check_branch
        %801 = sbr.rel (%p799) target = $region110
      $region109: #{tpu_custom_call.1} parent=5 // pred_region
        %s802 = ssub.s32 %s24, 2
        // Predicated region
        $region111: #{tpu_custom_call.1} parent=109 // pred_check
          %p803 = pneg %p205
        $region112: #{tpu_custom_call.1} parent=109 // pred_check_branch
          %805 = sbr.rel (%p803) target = $region114
        $region113: #{tpu_custom_call.1} parent=109 // pred_region
          %s806 = sand.u32 %s190, 1
          %s807 = scalar_lea.sflag [#allocation5], %s806
          %s808 = sand.u32 %s190, 1
          %s809 = smul.addr %s808, 8
          %s810 = scalar_lea.vmem [#allocation7], %s809
          %811 = dma.done %s807, 128
        $region114: #{tpu_custom_call.1} parent=109 // pred_fallthru
          _
        // Predicated region
        $region115: #{tpu_custom_call.1} parent=109 // pred_check
          %p812 = pneg %p231
        $region116: #{tpu_custom_call.1} parent=109 // pred_check_branch
          %814 = sbr.rel (%p812) target = $region118
        $region117: #{tpu_custom_call.1} parent=109 // pred_region
          %s815 = sand.u32 %s30, 1
          %s816 = scalar_lea.sflag [#allocation9], %s815
          %s817 = sand.u32 %s216, 1
          %s818 = smul.addr %s817, 8
          %s819 = scalar_lea.vmem [#allocation8], %s818
          %820 = dma.done %s816, 128
        $region118: #{tpu_custom_call.1} parent=109 // pred_fallthru
          _
        // Predicated region
        $region119: #{tpu_custom_call.1} parent=109 // pred_check
          %p821 = pneg %p257
        $region120: #{tpu_custom_call.1} parent=109 // pred_check_branch
          %823 = sbr.rel (%p821) target = $region122
        $region121: #{tpu_custom_call.1} parent=109 // pred_region
          %s824 = sand.u32 %s30, 1
          %s825 = scalar_lea.sflag [#allocation9], %s824
          %s826 = sand.u32 %s242, 1
          %s827 = smul.addr %s826, 8
          %s828 = scalar_lea.vmem [#allocation10], %s827
          %829 = dma.done %s825, 128
        $region122: #{tpu_custom_call.1} parent=109 // pred_fallthru
          _
      $region110: #{tpu_custom_call.1} parent=5 // pred_fallthru
        _
    $region6: #{tpu_custom_call.1} parent=1 // loop_footer
      %s28 = sadd.s32 1, %s24
    $region7: #{tpu_custom_call.1} parent=1 // loop_footer_branch
      %23 = sbr.rel target = $region3
    $region8: #{tpu_custom_call.1} parent=1 // loop_exit
      _
    %830 = vsyncpa [#allocation4], 1
    %s831 = scalar_lea.sflag [#allocation4], 1
    %832 = vsyncpa %s831, 1
    %833 = vsyncpa [#allocation5], 1
    %s834 = scalar_lea.sflag [#allocation5], 1
    %835 = vsyncpa %s834, 1
    %836 = vsyncpa [#allocation9], 1
    %s837 = scalar_lea.sflag [#allocation9], 1
    %838 = vsyncpa %s837, 1

</llo_original>
